<compile_context>
chip_gen: v7x
topology: tpu7x:2x2x1
jax: 0.10.0
libtpu: 0.0.40
codegen_flags: <defaults>
</compile_context>

<pallas_src>
import functools

import jax
import jax.numpy as jnp
from jax.experimental import pallas as pl
from jax.experimental.pallas import tpu as pltpu

_HIDDEN = 13
_BLOCK_ELEMS = 512 * 1024      # ~2 MiB f32 per block -> ~8 MiB VMEM total (fits
                               # every generation's default scoped limit).


def _mlp_kernel(params_ref, x_ref, o_ref, *, compute_dtype):
    # params_ref: SMEM f32[40] = [w1(13) | b1(13) | w2(13) | b2(1)]
    # x_ref/o_ref: VMEM (TB, LW) lane-dense batch tiles.
    x = x_ref[...]                                   # (TB, LW) f32
    xc = x.astype(compute_dtype)                     # no-op for f32 compute
    b2 = params_ref[3 * _HIDDEN]

    def term(j):
        w1j = params_ref[j].astype(compute_dtype)
        b1j = params_ref[_HIDDEN + j].astype(compute_dtype)
        w2j = params_ref[2 * _HIDDEN + j]            # accumulate in f32
        return w2j * jnp.tanh(w1j * xc + b1j).astype(jnp.float32)

    # Two independent accumulator chains; b2 folded into acc1 (scalar add, no
    # full-tile broadcast materialization).
    acc0 = term(0)
    acc1 = term(1) + b2
    for j in range(2, _HIDDEN, 2):
        acc0 = acc0 + term(j)
    for j in range(3, _HIDDEN, 2):
        acc1 = acc1 + term(j)
    o_ref[...] = (acc0 + acc1).astype(o_ref.dtype)


def _jnp_forward(x, w1, b1, w2, b2):
    # Fused-XLA reference path (small batches / ragged tail).
    return jnp.tanh(x @ w1 + b1) @ w2 + b2


def _pick_row_tile(rows, lane_width):
    """Adaptive row tile: ~2 MiB blocks, sublane-aligned, >=2 grid steps when
    there are enough rows (so both v7x TensorCores get work)."""
    tb_cap = max(8, _BLOCK_ELEMS // lane_width)
    if rows >= 16:
        tb_cap = min(tb_cap, max(8, ((rows // 2) // 8) * 8))
    tb = min(tb_cap, rows)
    if tb < rows:
        tb = max(8, (tb // 8) * 8)   # must be a multiple of 8 unless full extent
    return tb


def subclass_model_forward(x, w1, b1, w2, b2, *, min_kernel_elems=16384,
                           use_bf16_tanh=False):
    """x: (N, 1). w1: (1, 13), b1: (1, 13), w2: (13, 1), b2: (1, 1).

    Returns (N, 1), numerically equal to tanh(x @ w1 + b1) @ w2 + b2.
    `use_bf16_tanh=True` enables a faster bf16 EUP path on v6e/v7x (not
    bit-accurate vs f32; do not use on v5e).
    """
    n, in_f = x.shape
    assert in_f == 1
    out_dtype = x.dtype

    # Small-N fast path: fixed pallas_call + re-layout overhead dominates there.
    if n < min_kernel_elems:
        return _jnp_forward(x, w1, b1, w2, b2).astype(out_dtype)

    # Widest lane layout (up to 1024) that divides N exactly -> no padding and
    # no tail in the common case; otherwise 1024-wide rows plus a <1024-element
    # jnp tail.
    lane_width = 1024
    for lw in (1024, 512, 256, 128):
        if n % lw == 0:
            lane_width = lw
            break

    n_main = (n // lane_width) * lane_width
    if n_main == 0:
        return _jnp_forward(x, w1, b1, w2, b2).astype(out_dtype)
    rows = n_main // lane_width
    tb = _pick_row_tile(rows, lane_width)
    grid = pl.cdiv(rows, tb)     # ragged last block handled by Pallas (OOB
                                 # reads are don't-care, OOB writes dropped)

    # Pack the 40 parameters into one f32 vector that lives in SMEM.
    params = jnp.concatenate(
        [w1.reshape(-1), b1.reshape(-1), w2.reshape(-1), b2.reshape(-1)]
    ).astype(jnp.float32)                                   # (40,)

    # Lane-dense re-layout: (N, 1) -> (rows, lane_width). For contiguous data
    # this is a metadata-only reshape (no pad, no extra HBM pass) when there is
    # no tail.
    x_flat = x.reshape(-1).astype(jnp.float32)
    x2d = x_flat[:n_main].reshape(rows, lane_width)

    compute_dtype = jnp.bfloat16 if use_bf16_tanh else jnp.float32
    kernel = functools.partial(_mlp_kernel, compute_dtype=compute_dtype)

    cost = pl.CostEstimate(
        flops=4 * _HIDDEN * n_main,
        transcendentals=_HIDDEN * n_main,
        bytes_accessed=8 * n_main,
    )

    out2d = pl.pallas_call(
        kernel,
        out_shape=jax.ShapeDtypeStruct((rows, lane_width), jnp.float32),
        grid_spec=pltpu.PrefetchScalarGridSpec(
            num_scalar_prefetch=0,
            grid=(grid,),
            in_specs=[
                # All 40 weights/biases: one tiny SMEM-resident array.
                pl.BlockSpec(memory_space=pltpu.MemorySpace.SMEM),
                # Lane-dense batch tile.
                pl.BlockSpec((tb, lane_width), lambda i: (i, 0)),
            ],
            out_specs=pl.BlockSpec((tb, lane_width), lambda i: (i, 0)),
        ),
        compiler_params=pltpu.CompilerParams(
            # "parallel" lets the grid shard across v7x's two TensorCores;
            # _pick_row_tile guarantees >= 2 steps whenever rows >= 16.
            dimension_semantics=("parallel",),
        ),
        cost_estimate=cost,
    )(params, x2d)

    out_flat = out2d.reshape(-1)
    if n_main < n:
        # Ragged tail (< lane_width elements): tiny fused-XLA expression.
        tail = _jnp_forward(x_flat[n_main:].reshape(-1, 1).astype(jnp.float32),
                            w1, b1, w2, b2).reshape(-1)
        out_flat = jnp.concatenate([out_flat, tail])
    return out_flat.reshape(n, 1).astype(out_dtype)


def init_params(key):
    """Deterministic init mirroring PyTorch nn.Linear default:
    U(-1/sqrt(fan_in), 1/sqrt(fan_in)) for both weight and bias."""
    k1, k2, k3, k4 = jax.random.split(key, 4)
    bound1 = 1.0 / jnp.sqrt(1.0)    # hidden_linear: in_features = 1
    bound2 = 1.0 / jnp.sqrt(13.0)   # output_linear: in_features = 13
    w1 = jax.random.uniform(k1, (1, 13), jnp.float32, -bound1, bound1)
    b1 = jax.random.uniform(k2, (1, 13), jnp.float32, -bound1, bound1)
    w2 = jax.random.uniform(k3, (13, 1), jnp.float32, -bound2, bound2)
    b2 = jax.random.uniform(k4, (1, 1), jnp.float32, -bound2, bound2)
    return w1, b1, w2, b2


if __name__ == "__main__":
    key = jax.random.PRNGKey(0)
    k_x, k_p = jax.random.split(key)
    w1, b1, w2, b2 = init_params(k_p)

    # 1) Tiny batch -> fused-XLA fast path.
    x_small = jax.random.normal(k_x, (8, 1), dtype=jnp.float32)
    out_small = jax.block_until_ready(
        subclass_model_forward(x_small, w1, b1, w2, b2))
    ref_small = jnp.tanh(x_small @ w1 + b1) @ w2 + b2
    assert out_small.shape == (8, 1)
    assert jnp.allclose(out_small, ref_small, atol=1e-5, rtol=1e-5)

    # 2) Force the Pallas kernel path on a small batch:
    #    2176 = 17 * 128 -> (17, 128) layout, tb=8, ragged 3-step grid, no tail.
    x_k = jax.random.normal(k_x, (2176, 1), dtype=jnp.float32)
    out_k = jax.block_until_ready(
        subclass_model_forward(x_k, w1, b1, w2, b2, min_kernel_elems=0))
    ref_k = jnp.tanh(x_k @ w1 + b1) @ w2 + b2
    assert out_k.shape == (2176, 1)
    assert jnp.allclose(out_k, ref_k, atol=1e-5, rtol=1e-5)

    # 3) Kernel path with a ragged tail: 1300 = 1024 (kernel) + 276 (jnp tail).
    x_t = jax.random.normal(k_x, (1300, 1), dtype=jnp.float32)
    out_t = jax.block_until_ready(
        subclass_model_forward(x_t, w1, b1, w2, b2, min_kernel_elems=0))
    ref_t = jnp.tanh(x_t @ w1 + b1) @ w2 + b2
    assert out_t.shape == (1300, 1)
    assert jnp.allclose(out_t, ref_t, atol=1e-5, rtol=1e-5)

    print("KERNEL_OK")
</pallas_src>

<mosaic_0001>
module attributes {stable_mosaic.version = 11 : i64} {
  func.func @_mlp_kernel(%arg0: i32, %arg1: memref<40xf32, #tpu.memory_space<smem>>, %arg2: memref<8x128xf32, #tpu.memory_space<vmem>>, %arg3: memref<8x128xf32, #tpu.memory_space<vmem>>) attributes {dimension_semantics = [#tpu.dimension_semantics<parallel>], iteration_bounds = array<i64: 3>, scalar_prefetch = 0 : i64, scratch_operands = 0 : i64, tpu.core_type = #tpu.core_type<tc>, window_params = [{transform_indices = @transform_0, window_bounds = array<i64: 40>}, {transform_indices = @transform_1, window_bounds = array<i64: 8, 128>}, {transform_indices = @transform_2, window_bounds = array<i64: 8, 128>}]} {
    %c0 = arith.constant 0 : index
    %c0_0 = arith.constant 0 : index
    %0 = vector.load %arg2[%c0, %c0_0] : memref<8x128xf32, #tpu.memory_space<vmem>>, vector<8x128xf32>
    %c39 = arith.constant 39 : index
    %1 = memref.load %arg1[%c39] : memref<40xf32, #tpu.memory_space<smem>>
    %c0_1 = arith.constant 0 : index
    %2 = memref.load %arg1[%c0_1] : memref<40xf32, #tpu.memory_space<smem>>
    %c13 = arith.constant 13 : index
    %3 = memref.load %arg1[%c13] : memref<40xf32, #tpu.memory_space<smem>>
    %c26 = arith.constant 26 : index
    %4 = memref.load %arg1[%c26] : memref<40xf32, #tpu.memory_space<smem>>
    %5 = vector.broadcast %2 : f32 to vector<8x128xf32>
    %6 = arith.mulf %5, %0 : vector<8x128xf32>
    %7 = vector.broadcast %3 : f32 to vector<8x128xf32>
    %8 = arith.addf %6, %7 : vector<8x128xf32>
    %9 = math.tanh %8 : vector<8x128xf32>
    %10 = vector.broadcast %4 : f32 to vector<8x128xf32>
    %11 = arith.mulf %10, %9 : vector<8x128xf32>
    %c1 = arith.constant 1 : index
    %12 = memref.load %arg1[%c1] : memref<40xf32, #tpu.memory_space<smem>>
    %c14 = arith.constant 14 : index
    %13 = memref.load %arg1[%c14] : memref<40xf32, #tpu.memory_space<smem>>
    %c27 = arith.constant 27 : index
    %14 = memref.load %arg1[%c27] : memref<40xf32, #tpu.memory_space<smem>>
    %15 = vector.broadcast %12 : f32 to vector<8x128xf32>
    %16 = arith.mulf %15, %0 : vector<8x128xf32>
    %17 = vector.broadcast %13 : f32 to vector<8x128xf32>
    %18 = arith.addf %16, %17 : vector<8x128xf32>
    %19 = math.tanh %18 : vector<8x128xf32>
    %20 = vector.broadcast %14 : f32 to vector<8x128xf32>
    %21 = arith.mulf %20, %19 : vector<8x128xf32>
    %22 = vector.broadcast %1 : f32 to vector<8x128xf32>
    %23 = arith.addf %21, %22 : vector<8x128xf32>
    %c2 = arith.constant 2 : index
    %24 = memref.load %arg1[%c2] : memref<40xf32, #tpu.memory_space<smem>>
    %c15 = arith.constant 15 : index
    %25 = memref.load %arg1[%c15] : memref<40xf32, #tpu.memory_space<smem>>
    %c28 = arith.constant 28 : index
    %26 = memref.load %arg1[%c28] : memref<40xf32, #tpu.memory_space<smem>>
    %27 = vector.broadcast %24 : f32 to vector<8x128xf32>
    %28 = arith.mulf %27, %0 : vector<8x128xf32>
    %29 = vector.broadcast %25 : f32 to vector<8x128xf32>
    %30 = arith.addf %28, %29 : vector<8x128xf32>
    %31 = math.tanh %30 : vector<8x128xf32>
    %32 = vector.broadcast %26 : f32 to vector<8x128xf32>
    %33 = arith.mulf %32, %31 : vector<8x128xf32>
    %34 = arith.addf %11, %33 : vector<8x128xf32>
    %c4 = arith.constant 4 : index
    %35 = memref.load %arg1[%c4] : memref<40xf32, #tpu.memory_space<smem>>
    %c17 = arith.constant 17 : index
    %36 = memref.load %arg1[%c17] : memref<40xf32, #tpu.memory_space<smem>>
    %c30 = arith.constant 30 : index
    %37 = memref.load %arg1[%c30] : memref<40xf32, #tpu.memory_space<smem>>
    %38 = vector.broadcast %35 : f32 to vector<8x128xf32>
    %39 = arith.mulf %38, %0 : vector<8x128xf32>
    %40 = vector.broadcast %36 : f32 to vector<8x128xf32>
    %41 = arith.addf %39, %40 : vector<8x128xf32>
    %42 = math.tanh %41 : vector<8x128xf32>
    %43 = vector.broadcast %37 : f32 to vector<8x128xf32>
    %44 = arith.mulf %43, %42 : vector<8x128xf32>
    %45 = arith.addf %34, %44 : vector<8x128xf32>
    %c6 = arith.constant 6 : index
    %46 = memref.load %arg1[%c6] : memref<40xf32, #tpu.memory_space<smem>>
    %c19 = arith.constant 19 : index
    %47 = memref.load %arg1[%c19] : memref<40xf32, #tpu.memory_space<smem>>
    %c32 = arith.constant 32 : index
    %48 = memref.load %arg1[%c32] : memref<40xf32, #tpu.memory_space<smem>>
    %49 = vector.broadcast %46 : f32 to vector<8x128xf32>
    %50 = arith.mulf %49, %0 : vector<8x128xf32>
    %51 = vector.broadcast %47 : f32 to vector<8x128xf32>
    %52 = arith.addf %50, %51 : vector<8x128xf32>
    %53 = math.tanh %52 : vector<8x128xf32>
    %54 = vector.broadcast %48 : f32 to vector<8x128xf32>
    %55 = arith.mulf %54, %53 : vector<8x128xf32>
    %56 = arith.addf %45, %55 : vector<8x128xf32>
    %c8 = arith.constant 8 : index
    %57 = memref.load %arg1[%c8] : memref<40xf32, #tpu.memory_space<smem>>
    %c21 = arith.constant 21 : index
    %58 = memref.load %arg1[%c21] : memref<40xf32, #tpu.memory_space<smem>>
    %c34 = arith.constant 34 : index
    %59 = memref.load %arg1[%c34] : memref<40xf32, #tpu.memory_space<smem>>
    %60 = vector.broadcast %57 : f32 to vector<8x128xf32>
    %61 = arith.mulf %60, %0 : vector<8x128xf32>
    %62 = vector.broadcast %58 : f32 to vector<8x128xf32>
    %63 = arith.addf %61, %62 : vector<8x128xf32>
    %64 = math.tanh %63 : vector<8x128xf32>
    %65 = vector.broadcast %59 : f32 to vector<8x128xf32>
    %66 = arith.mulf %65, %64 : vector<8x128xf32>
    %67 = arith.addf %56, %66 : vector<8x128xf32>
    %c10 = arith.constant 10 : index
    %68 = memref.load %arg1[%c10] : memref<40xf32, #tpu.memory_space<smem>>
    %c23 = arith.constant 23 : index
    %69 = memref.load %arg1[%c23] : memref<40xf32, #tpu.memory_space<smem>>
    %c36 = arith.constant 36 : index
    %70 = memref.load %arg1[%c36] : memref<40xf32, #tpu.memory_space<smem>>
    %71 = vector.broadcast %68 : f32 to vector<8x128xf32>
    %72 = arith.mulf %71, %0 : vector<8x128xf32>
    %73 = vector.broadcast %69 : f32 to vector<8x128xf32>
    %74 = arith.addf %72, %73 : vector<8x128xf32>
    %75 = math.tanh %74 : vector<8x128xf32>
    %76 = vector.broadcast %70 : f32 to vector<8x128xf32>
    %77 = arith.mulf %76, %75 : vector<8x128xf32>
    %78 = arith.addf %67, %77 : vector<8x128xf32>
    %c12 = arith.constant 12 : index
    %79 = memref.load %arg1[%c12] : memref<40xf32, #tpu.memory_space<smem>>
    %c25 = arith.constant 25 : index
    %80 = memref.load %arg1[%c25] : memref<40xf32, #tpu.memory_space<smem>>
    %c38 = arith.constant 38 : index
    %81 = memref.load %arg1[%c38] : memref<40xf32, #tpu.memory_space<smem>>
    %82 = vector.broadcast %79 : f32 to vector<8x128xf32>
    %83 = arith.mulf %82, %0 : vector<8x128xf32>
    %84 = vector.broadcast %80 : f32 to vector<8x128xf32>
    %85 = arith.addf %83, %84 : vector<8x128xf32>
    %86 = math.tanh %85 : vector<8x128xf32>
    %87 = vector.broadcast %81 : f32 to vector<8x128xf32>
    %88 = arith.mulf %87, %86 : vector<8x128xf32>
    %89 = arith.addf %78, %88 : vector<8x128xf32>
    %c3 = arith.constant 3 : index
    %90 = memref.load %arg1[%c3] : memref<40xf32, #tpu.memory_space<smem>>
    %c16 = arith.constant 16 : index
    %91 = memref.load %arg1[%c16] : memref<40xf32, #tpu.memory_space<smem>>
    %c29 = arith.constant 29 : index
    %92 = memref.load %arg1[%c29] : memref<40xf32, #tpu.memory_space<smem>>
    %93 = vector.broadcast %90 : f32 to vector<8x128xf32>
    %94 = arith.mulf %93, %0 : vector<8x128xf32>
    %95 = vector.broadcast %91 : f32 to vector<8x128xf32>
    %96 = arith.addf %94, %95 : vector<8x128xf32>
    %97 = math.tanh %96 : vector<8x128xf32>
    %98 = vector.broadcast %92 : f32 to vector<8x128xf32>
    %99 = arith.mulf %98, %97 : vector<8x128xf32>
    %100 = arith.addf %23, %99 : vector<8x128xf32>
    %c5 = arith.constant 5 : index
    %101 = memref.load %arg1[%c5] : memref<40xf32, #tpu.memory_space<smem>>
    %c18 = arith.constant 18 : index
    %102 = memref.load %arg1[%c18] : memref<40xf32, #tpu.memory_space<smem>>
    %c31 = arith.constant 31 : index
    %103 = memref.load %arg1[%c31] : memref<40xf32, #tpu.memory_space<smem>>
    %104 = vector.broadcast %101 : f32 to vector<8x128xf32>
    %105 = arith.mulf %104, %0 : vector<8x128xf32>
    %106 = vector.broadcast %102 : f32 to vector<8x128xf32>
    %107 = arith.addf %105, %106 : vector<8x128xf32>
    %108 = math.tanh %107 : vector<8x128xf32>
    %109 = vector.broadcast %103 : f32 to vector<8x128xf32>
    %110 = arith.mulf %109, %108 : vector<8x128xf32>
    %111 = arith.addf %100, %110 : vector<8x128xf32>
    %c7 = arith.constant 7 : index
    %112 = memref.load %arg1[%c7] : memref<40xf32, #tpu.memory_space<smem>>
    %c20 = arith.constant 20 : index
    %113 = memref.load %arg1[%c20] : memref<40xf32, #tpu.memory_space<smem>>
    %c33 = arith.constant 33 : index
    %114 = memref.load %arg1[%c33] : memref<40xf32, #tpu.memory_space<smem>>
    %115 = vector.broadcast %112 : f32 to vector<8x128xf32>
    %116 = arith.mulf %115, %0 : vector<8x128xf32>
    %117 = vector.broadcast %113 : f32 to vector<8x128xf32>
    %118 = arith.addf %116, %117 : vector<8x128xf32>
    %119 = math.tanh %118 : vector<8x128xf32>
    %120 = vector.broadcast %114 : f32 to vector<8x128xf32>
    %121 = arith.mulf %120, %119 : vector<8x128xf32>
    %122 = arith.addf %111, %121 : vector<8x128xf32>
    %c9 = arith.constant 9 : index
    %123 = memref.load %arg1[%c9] : memref<40xf32, #tpu.memory_space<smem>>
    %c22 = arith.constant 22 : index
    %124 = memref.load %arg1[%c22] : memref<40xf32, #tpu.memory_space<smem>>
    %c35 = arith.constant 35 : index
    %125 = memref.load %arg1[%c35] : memref<40xf32, #tpu.memory_space<smem>>
    %126 = vector.broadcast %123 : f32 to vector<8x128xf32>
    %127 = arith.mulf %126, %0 : vector<8x128xf32>
    %128 = vector.broadcast %124 : f32 to vector<8x128xf32>
    %129 = arith.addf %127, %128 : vector<8x128xf32>
    %130 = math.tanh %129 : vector<8x128xf32>
    %131 = vector.broadcast %125 : f32 to vector<8x128xf32>
    %132 = arith.mulf %131, %130 : vector<8x128xf32>
    %133 = arith.addf %122, %132 : vector<8x128xf32>
    %c11 = arith.constant 11 : index
    %134 = memref.load %arg1[%c11] : memref<40xf32, #tpu.memory_space<smem>>
    %c24 = arith.constant 24 : index
    %135 = memref.load %arg1[%c24] : memref<40xf32, #tpu.memory_space<smem>>
    %c37 = arith.constant 37 : index
    %136 = memref.load %arg1[%c37] : memref<40xf32, #tpu.memory_space<smem>>
    %137 = vector.broadcast %134 : f32 to vector<8x128xf32>
    %138 = arith.mulf %137, %0 : vector<8x128xf32>
    %139 = vector.broadcast %135 : f32 to vector<8x128xf32>
    %140 = arith.addf %138, %139 : vector<8x128xf32>
    %141 = math.tanh %140 : vector<8x128xf32>
    %142 = vector.broadcast %136 : f32 to vector<8x128xf32>
    %143 = arith.mulf %142, %141 : vector<8x128xf32>
    %144 = arith.addf %133, %143 : vector<8x128xf32>
    %145 = arith.addf %89, %144 : vector<8x128xf32>
    %c0_2 = arith.constant 0 : index
    %c0_3 = arith.constant 0 : index
    %146 = vector.load %arg3[%c0_2, %c0_3] : memref<8x128xf32, #tpu.memory_space<vmem>>, vector<8x128xf32>
    tpu.vector_store %arg3[%c0_2, %c0_3], %145 {strides = array<i32>} : memref<8x128xf32, #tpu.memory_space<vmem>>, vector<8x128xf32>,
    return
  }
  func.func @transform_0(%arg0: i32) -> i32 {
    %c0_i32 = arith.constant 0 : i32
    %c0_i32_0 = arith.constant 0 : i32
    return %c0_i32 : i32
  }
  func.func @transform_1(%arg0: i32) -> (i32, i32) {
    %c0_i32 = arith.constant 0 : i32
    %c0_i32_0 = arith.constant 0 : i32
    return %arg0, %c0_i32 : i32, i32
  }
  func.func @transform_2(%arg0: i32) -> (i32, i32) {
    %c0_i32 = arith.constant 0 : i32
    %c0_i32_0 = arith.constant 0 : i32
    return %arg0, %c0_i32 : i32, i32
  }
}

</mosaic_0001>

<llo_original>
// kernel: tpu_custom_call.1
$region0: #{tpu_custom_call.1}
  #allocation0 [shape = 'u32[]', space=smem, size = 0x4, offset = 0x4, fixed_abs, tag = 'smem constant byte address 0x4 - core index']
  #allocation1 [shape = 'u32[144,128]{1,0:T(1,128)}', space=vmem, size = 0x12000, scoped, tag = 'internal scratch']
  %s0 = inlined_call_operand.hbm [shape: f32[40], index: 0, kind: input, shape index: {}]
  %s1 = inlined_call_operand.hbm [shape: f32[17,128], index: 1, kind: input, shape index: {}]
  %s2 = inlined_call_operand.hbm [shape: f32[17,128], index: 2, kind: output, shape index: {}]
  %s3 = sld [smem:[#allocation0]]
  $region49: #{tpu_custom_call.1} parent=0
    _
  %s5 = ssub.s32 1, %s3
  %s6 = scalar_select 0, %s5, %s3
  $region1: #{tpu_custom_call.1} parent=0
    #allocation2 [shape = 'u8[512]{0}', space=smem, size = 0x200, scoped, tag = 'input window, operand 0, single buffered']
    #allocation3 [shape = 's32[2]{0}', space=sflag, size = 0x8, scoped, tag = 'scoped memory for tpu_custom_call.1']
    #allocation4 [shape = 's32[2]{0}', space=sflag, size = 0x8, scoped, tag = 'scoped memory for tpu_custom_call.1']
    #allocation5 [shape = 's32[2]{0}', space=sflag, size = 0x8, scoped, tag = 'scoped memory for tpu_custom_call.1']
    #allocation6 [shape = 'u8[8192]{0}', space=vmem, size = 0x2000, scoped, tag = 'input window, operand 1']
    #allocation7 [shape = 'u8[8192]{0}', space=vmem, size = 0x2000, scoped, tag = 'output window, operand 0']
    %7 = vsyncpa [#allocation5], 0
    %8 = vsyncpa [#allocation3], 0
    %s9 = scalar_lea.sflag [#allocation3], 1
    %10 = vsyncpa %s9, 0
    %11 = vsyncpa [#allocation4], 0
    %s12 = scalar_lea.sflag [#allocation4], 1
    %13 = vsyncpa %s12, 0
    loop: start=0, step=1, limit=5
    $region2: #{tpu_custom_call.1} parent=1 // loop_pre_header
      _
    $region3: #{tpu_custom_call.1} parent=1 // loop_header
      %s15 = sphi 0, %s19
      %p16 = scmp.ge.s32.totalorder %s15, 5
      %s23 = sphi 0, %s23
      %s25 = sphi 0, %s23
      %s26 = sphi 0, %s25
      %s40 = sphi 0, %s26
      %s46 = sphi 0, %s48
      %s49 = sphi 0, %s46
      %s50 = sphi 0, %s49
      %s66 = sphi 0, %s50
      %s72 = sphi 0, %s74
      %s75 = sphi 0, %s72
      %s76 = sphi 0, %s75
      %s92 = sphi 0, %s76
    $region4: #{tpu_custom_call.1} parent=1 // loop_header_branch
      %18 = sbr.rel (%p16) target = $region8
    $region5: #{tpu_custom_call.1} parent=1 // loop_body
      %s20 = ssub.s32 %s15, 1
      %s21 = ssub.s32 %s15, 2
      %s22 = sadd.s32 %s15, 1
      %s24 = sadd.s32 %s23, 1
      %p27 = scmp.eq.s32.totalorder %s15, 2
      %p28 = scmp.ne.s32.totalorder %s23, %s25
      %p29 = scmp.eq.s32.totalorder %s15, 0
      %p30 = por %p28, %p29
      %p31 = scmp.ne.s32.totalorder %s23, %s25
      %p32 = scmp.eq.s32.totalorder %s20, 2
      %p33 = por %p31, %p32
      %p34 = scmp.ne.s32.totalorder %s25, %s26
      %p35 = scmp.eq.s32.totalorder %s20, 0
      %p36 = por %p34, %p35
      %p37 = scmp.ne.s32.totalorder %s25, %s26
      %p38 = scmp.eq.s32.totalorder %s21, 2
      %p39 = por %p37, %p38
      %p41 = scmp.ne.s32.totalorder %s26, %s40
      %p42 = scmp.eq.s32.totalorder %s21, 0
      %p43 = por %p41, %p42
      %s44 = ssub.s32 %s15, %s22
      %p45 = scmp.eq.s32.totalorder %s44, 0
      %s47 = sadd.s32 %s46, 1
      %s48 = scalar_select %p45, %s46, %s47
      %p51 = pneg %p45
      %p52 = scmp.eq.s32.totalorder %s15, 2
      %p53 = por %p51, %p52
      %p54 = scmp.ne.s32.totalorder %s46, %s49
      %p55 = scmp.eq.s32.totalorder %s15, 0
      %p56 = por %p54, %p55
      %p57 = scmp.ne.s32.totalorder %s46, %s49
      %p58 = scmp.eq.s32.totalorder %s20, 2
      %p59 = por %p57, %p58
      %p60 = scmp.ne.s32.totalorder %s49, %s50
      %p61 = scmp.eq.s32.totalorder %s20, 0
      %p62 = por %p60, %p61
      %p63 = scmp.ne.s32.totalorder %s49, %s50
      %p64 = scmp.eq.s32.totalorder %s21, 2
      %p65 = por %p63, %p64
      %p67 = scmp.ne.s32.totalorder %s50, %s66
      %p68 = scmp.eq.s32.totalorder %s21, 0
      %p69 = por %p67, %p68
      %s70 = ssub.s32 %s15, %s22
      %p71 = scmp.eq.s32.totalorder %s70, 0
      %s73 = sadd.s32 %s72, 1
      %s74 = scalar_select %p71, %s72, %s73
      %p77 = pneg %p71
      %p78 = scmp.eq.s32.totalorder %s15, 2
      %p79 = por %p77, %p78
      %p80 = scmp.ne.s32.totalorder %s72, %s75
      %p81 = scmp.eq.s32.totalorder %s15, 0
      %p82 = por %p80, %p81
      %p83 = scmp.ne.s32.totalorder %s72, %s75
      %p84 = scmp.eq.s32.totalorder %s20, 2
      %p85 = por %p83, %p84
      %p86 = scmp.ne.s32.totalorder %s75, %s76
      %p87 = scmp.eq.s32.totalorder %s20, 0
      %p88 = por %p86, %p87
      %p89 = scmp.ne.s32.totalorder %s75, %s76
      %p90 = scmp.eq.s32.totalorder %s21, 2
      %p91 = por %p89, %p90
      %p93 = scmp.ne.s32.totalorder %s76, %s92
      %p94 = scmp.eq.s32.totalorder %s21, 0
      %p95 = por %p93, %p94
      %p96 = scmp.le.s32.totalorder 1, %s15
      %p97 = scmp.lt.s32.totalorder %s15, 4
      %p98 = pnand %p96, %p97
      %p99 = pneg %p98
      // Predicated region
      $region9: #{tpu_custom_call.1} parent=5 // pred_check
        _
      $region10: #{tpu_custom_call.1} parent=5 // pred_check_branch
        %101 = sbr.rel (%p98) target = $region12
      $region11: #{tpu_custom_call.1} parent=5 // pred_region
        %s102 = ssub.s32 %s15, 1
        // Predicated region
        $region13: #{tpu_custom_call.1} parent=11 // pred_check
          %p103 = pneg %p36
        $region14: #{tpu_custom_call.1} parent=11 // pred_check_branch
          %105 = sbr.rel (%p103) target = $region16
        $region15: #{tpu_custom_call.1} parent=11 // pred_region
          %s107 = ssub.s32 16, 16
          %108 = vsyncadd [#allocation5], %s107
          %111 = dma.hbm_to_smem %s0, 16, [#allocation2], [#allocation5]
        $region16: #{tpu_custom_call.1} parent=11 // pred_fallthru
          _
      $region12: #{tpu_custom_call.1} parent=5 // pred_fallthru
        _
      %p112 = scmp.lt.s32.totalorder %s15, 3
      // Predicated region
      $region17: #{tpu_custom_call.1} parent=5 // pred_check
        %p113 = pneg %p112
      $region18: #{tpu_custom_call.1} parent=5 // pred_check_branch
        %115 = sbr.rel (%p113) target = $region20
      $region19: #{tpu_custom_call.1} parent=5 // pred_region
        // Predicated region
        $region21: #{tpu_custom_call.1} parent=19 // pred_check
          %p116 = pneg %p56
        $region22: #{tpu_custom_call.1} parent=19 // pred_check_branch
          %118 = sbr.rel (%p116) target = $region24
        $region23: #{tpu_custom_call.1} parent=19 // pred_region
          %s119 = sand.u32 %s46, 1
          %s120 = scalar_lea.sflag [#allocation3], %s119
          %s121 = sand.u32 %s46, 1
          %s122 = smul.addr %s121, 8
          %s123 = scalar_lea.vmem [#allocation6], %s122
          %s125 = ssub.s32 128, 128
          %126 = vsyncadd %s120, %s125
          %s127 = smul.addr %s15, 128
          %s128 = scalar_lea.hbm %s1, %s127
          %s130 = sshll.u32 %s123, 4
          %s131 = int_to_ptr.vmem [resolvable:$true] %s130
          %133 = dma.hbm_to_vmem [thread:$0]  %s128, 128, %s131, %s120
        $region24: #{tpu_custom_call.1} parent=19 // pred_fallthru
          _
      $region20: #{tpu_custom_call.1} parent=5 // pred_fallthru
        _
      %p134 = scmp.le.s32.totalorder 1, %s15
      %p135 = scmp.lt.s32.totalorder %s15, 4
      %p136 = pnand %p134, %p135
      %p137 = pneg %p136
      // Predicated region
      $region25: #{tpu_custom_call.1} parent=5 // pred_check
        _
      $region26: #{tpu_custom_call.1} parent=5 // pred_check_branch
        %139 = sbr.rel (%p136) target = $region28
      $region27: #{tpu_custom_call.1} parent=5 // pred_region
        %s140 = ssub.s32 %s15, 1
        // Predicated region
        $region29: #{tpu_custom_call.1} parent=27 // pred_check
          %p141 = pneg %p36
        $region30: #{tpu_custom_call.1} parent=27 // pred_check_branch
          %143 = sbr.rel (%p141) target = $region32
        $region31: #{tpu_custom_call.1} parent=27 // pred_region
          %144 = dma.done [#allocation5], 16
        $region32: #{tpu_custom_call.1} parent=27 // pred_fallthru
          _
        %s145 = sand.u32 %s49, 1
        %s146 = scalar_lea.sflag [#allocation3], %s145
        %s147 = sand.u32 %s49, 1
        %s148 = smul.addr %s147, 8
        %s149 = scalar_lea.vmem [#allocation6], %s148
        // Predicated region
        $region33: #{tpu_custom_call.1} parent=27 // pred_check
          %p150 = pneg %p62
        $region34: #{tpu_custom_call.1} parent=27 // pred_check_branch
          %152 = sbr.rel (%p150) target = $region36
        $region35: #{tpu_custom_call.1} parent=27 // pred_region
          %153 = dma.done %s146, 128
        $region36: #{tpu_custom_call.1} parent=27 // pred_fallthru
          _
        %154 = sfence
        %p155 = pneg %p36
        %p156 = pneg %p33
        %s157 = sand.u32 %s49, 1
        %s158 = scalar_lea.sflag [#allocation3], %s157
        %s159 = sand.u32 %s49, 1
        %s160 = smul.addr %s159, 8
        %s161 = scalar_lea.vmem [#allocation6], %s160
        %p162 = pneg %p62
        %p163 = pneg %p59
        %p164 = pneg %p88
        %p165 = pneg %p85
        %s166 = sand.u32 %s75, 1
        %s167 = scalar_lea.sflag [#allocation4], %s166
        %s168 = sand.u32 %s75, 1
        %s169 = smul.addr %s168, 8
        %s170 = scalar_lea.vmem [#allocation7], %s169
        %v171 = vld [vmem:[%s149] sm:$0xff]
        %s172 = sld [smem:[#allocation2 + $0x27]]
        %s173 = sld [smem:[#allocation2]]
        %s174 = sld [smem:[#allocation2 + $0xd]]
        %s175 = sld [smem:[#allocation2 + $0x1a]]
        %v176 = vstv %s173
        %v177 = vmul.f32 %v176, %v171
        %v178 = vstv %s174
        %v179 = vadd.f32 %v177, %v178
        %v180 = vtanh.pop %v179
        %v181 = vstv %s175
        %v182 = vmul.f32 %v181, %v180
        %s183 = sld [smem:[#allocation2 + $0x1]]
        %s184 = sld [smem:[#allocation2 + $0xe]]
        %s185 = sld [smem:[#allocation2 + $0x1b]]
        %v186 = vstv %s183
        %v187 = vmul.f32 %v186, %v171
        %v188 = vstv %s184
        %v189 = vadd.f32 %v187, %v188
        %v190 = vtanh.pop %v189
        %v191 = vstv %s185
        %v192 = vmul.f32 %v191, %v190
        %v193 = vstv %s172
        %v194 = vadd.f32 %v192, %v193
        %s195 = sld [smem:[#allocation2 + $0x2]]
        %s196 = sld [smem:[#allocation2 + $0xf]]
        %s197 = sld [smem:[#allocation2 + $0x1c]]
        %v198 = vstv %s195
        %v199 = vmul.f32 %v198, %v171
        %v200 = vstv %s196
        %v201 = vadd.f32 %v199, %v200
        %v202 = vtanh.pop %v201
        %v203 = vstv %s197
        %v204 = vmul.f32 %v203, %v202
        %v205 = vadd.f32 %v182, %v204
        %s206 = sld [smem:[#allocation2 + $0x4]]
        %s207 = sld [smem:[#allocation2 + $0x11]]
        %s208 = sld [smem:[#allocation2 + $0x1e]]
        %v209 = vstv %s206
        %v210 = vmul.f32 %v209, %v171
        %v211 = vstv %s207
        %v212 = vadd.f32 %v210, %v211
        %v213 = vtanh.pop %v212
        %v214 = vstv %s208
        %v215 = vmul.f32 %v214, %v213
        %v216 = vadd.f32 %v205, %v215
        %s217 = sld [smem:[#allocation2 + $0x6]]
        %s218 = sld [smem:[#allocation2 + $0x13]]
        %s219 = sld [smem:[#allocation2 + $0x20]]
        %v220 = vstv %s217
        %v221 = vmul.f32 %v220, %v171
        %v222 = vstv %s218
        %v223 = vadd.f32 %v221, %v222
        %v224 = vtanh.pop %v223
        %v225 = vstv %s219
        %v226 = vmul.f32 %v225, %v224
        %v227 = vadd.f32 %v216, %v226
        %s228 = sld [smem:[#allocation2 + $0x8]]
        %s229 = sld [smem:[#allocation2 + $0x15]]
        %s230 = sld [smem:[#allocation2 + $0x22]]
        %v231 = vstv %s228
        %v232 = vmul.f32 %v231, %v171
        %v233 = vstv %s229
        %v234 = vadd.f32 %v232, %v233
        %v235 = vtanh.pop %v234
        %v236 = vstv %s230
        %v237 = vmul.f32 %v236, %v235
        %v238 = vadd.f32 %v227, %v237
        %s239 = sld [smem:[#allocation2 + $0xa]]
        %s240 = sld [smem:[#allocation2 + $0x17]]
        %s241 = sld [smem:[#allocation2 + $0x24]]
        %v242 = vstv %s239
        %v243 = vmul.f32 %v242, %v171
        %v244 = vstv %s240
        %v245 = vadd.f32 %v243, %v244
        %v246 = vtanh.pop %v245
        %v247 = vstv %s241
        %v248 = vmul.f32 %v247, %v246
        %v249 = vadd.f32 %v238, %v248
        %s250 = sld [smem:[#allocation2 + $0xc]]
        %s251 = sld [smem:[#allocation2 + $0x19]]
        %s252 = sld [smem:[#allocation2 + $0x26]]
        %v253 = vstv %s250
        %v254 = vmul.f32 %v253, %v171
        %v255 = vstv %s251
        %v256 = vadd.f32 %v254, %v255
        %v257 = vtanh.pop %v256
        %v258 = vstv %s252
        %v259 = vmul.f32 %v258, %v257
        %v260 = vadd.f32 %v249, %v259
        %s261 = sld [smem:[#allocation2 + $0x3]]
        %s262 = sld [smem:[#allocation2 + $0x10]]
        %s263 = sld [smem:[#allocation2 + $0x1d]]
        %v264 = vstv %s261
        %v265 = vmul.f32 %v264, %v171
        %v266 = vstv %s262
        %v267 = vadd.f32 %v265, %v266
        %v268 = vtanh.pop %v267
        %v269 = vstv %s263
        %v270 = vmul.f32 %v269, %v268
        %v271 = vadd.f32 %v194, %v270
        %s272 = sld [smem:[#allocation2 + $0x5]]
        %s273 = sld [smem:[#allocation2 + $0x12]]
        %s274 = sld [smem:[#allocation2 + $0x1f]]
        %v275 = vstv %s272
        %v276 = vmul.f32 %v275, %v171
        %v277 = vstv %s273
        %v278 = vadd.f32 %v276, %v277
        %v279 = vtanh.pop %v278
        %v280 = vstv %s274
        %v281 = vmul.f32 %v280, %v279
        %v282 = vadd.f32 %v271, %v281
        %s283 = sld [smem:[#allocation2 + $0x7]]
        %s284 = sld [smem:[#allocation2 + $0x14]]
        %s285 = sld [smem:[#allocation2 + $0x21]]
        %v286 = vstv %s283
        %v287 = vmul.f32 %v286, %v171
        %v288 = vstv %s284
        %v289 = vadd.f32 %v287, %v288
        %v290 = vtanh.pop %v289
        %v291 = vstv %s285
        %v292 = vmul.f32 %v291, %v290
        %v293 = vadd.f32 %v282, %v292
        %s294 = sld [smem:[#allocation2 + $0x9]]
        %s295 = sld [smem:[#allocation2 + $0x16]]
        %s296 = sld [smem:[#allocation2 + $0x23]]
        %v297 = vstv %s294
        %v298 = vmul.f32 %v297, %v171
        %v299 = vstv %s295
        %v300 = vadd.f32 %v298, %v299
        %v301 = vtanh.pop %v300
        %v302 = vstv %s296
        %v303 = vmul.f32 %v302, %v301
        %v304 = vadd.f32 %v293, %v303
        %s305 = sld [smem:[#allocation2 + $0xb]]
        %s306 = sld [smem:[#allocation2 + $0x18]]
        %s307 = sld [smem:[#allocation2 + $0x25]]
        %v308 = vstv %s305
        %v309 = vmul.f32 %v308, %v171
        %v310 = vstv %s306
        %v311 = vadd.f32 %v309, %v310
        %v312 = vtanh.pop %v311
        %v313 = vstv %s307
        %v314 = vmul.f32 %v313, %v312
        %v315 = vadd.f32 %v304, %v314
        %v316 = vadd.f32 %v260, %v315
        %317 = vst [vmem:[%s170] sm:$0xff] %v316
        %s318 = sand.u32 %s75, 1
        %s319 = scalar_lea.sflag [#allocation4], %s318
        %s320 = sand.u32 %s75, 1
        %s321 = smul.addr %s320, 8
        %s322 = scalar_lea.vmem [#allocation7], %s321
        // Predicated region
        $region37: #{tpu_custom_call.1} parent=27 // pred_check
          %p323 = pneg %p85
        $region38: #{tpu_custom_call.1} parent=27 // pred_check_branch
          %325 = sbr.rel (%p323) target = $region40
        $region39: #{tpu_custom_call.1} parent=27 // pred_region
          %s327 = ssub.s32 128, 128
          %328 = vsyncadd %s319, %s327
          %s329 = smul.addr %s20, 128
          %s330 = scalar_lea.hbm %s2, %s329
          %s332 = sshll.u32 %s322, 4
          %s333 = int_to_ptr.vmem [resolvable:$true] %s332
          %335 = dma.vmem_to_hbm [thread:$0]  %s333, 128, %s330, %s319
        $region40: #{tpu_custom_call.1} parent=27 // pred_fallthru
          _
      $region28: #{tpu_custom_call.1} parent=5 // pred_fallthru
        _
      %p336 = scmp.le.s32.totalorder 2, %s15
      // Predicated region
      $region41: #{tpu_custom_call.1} parent=5 // pred_check
        %p337 = pneg %p336
      $region42: #{tpu_custom_call.1} parent=5 // pred_check_branch
        %339 = sbr.rel (%p337) target = $region44
      $region43: #{tpu_custom_call.1} parent=5 // pred_region
        %s340 = ssub.s32 %s15, 2
        // Predicated region
        $region45: #{tpu_custom_call.1} parent=43 // pred_check
          %p341 = pneg %p91
        $region46: #{tpu_custom_call.1} parent=43 // pred_check_branch
          %343 = sbr.rel (%p341) target = $region48
        $region47: #{tpu_custom_call.1} parent=43 // pred_region
          %s344 = sand.u32 %s76, 1
          %s345 = scalar_lea.sflag [#allocation4], %s344
          %s346 = sand.u32 %s76, 1
          %s347 = smul.addr %s346, 8
          %s348 = scalar_lea.vmem [#allocation7], %s347
          %349 = dma.done %s345, 128
        $region48: #{tpu_custom_call.1} parent=43 // pred_fallthru
          _
      $region44: #{tpu_custom_call.1} parent=5 // pred_fallthru
        _
    $region6: #{tpu_custom_call.1} parent=1 // loop_footer
      %s19 = sadd.s32 1, %s15
    $region7: #{tpu_custom_call.1} parent=1 // loop_footer_branch
      %14 = sbr.rel target = $region3
    $region8: #{tpu_custom_call.1} parent=1 // loop_exit
      _
    %350 = vsyncpa [#allocation3], 1
    %s351 = scalar_lea.sflag [#allocation3], 1
    %352 = vsyncpa %s351, 1
    %353 = vsyncpa [#allocation4], 1
    %s354 = scalar_lea.sflag [#allocation4], 1
    %355 = vsyncpa %s354, 1
    %356 = vsyncpa [#allocation5], 1
    %s357 = scalar_lea.sflag [#allocation5], 1
    %358 = vsyncpa %s357, 1

</llo_original>
